<compile_context>
chip_gen: v5e
topology: v5e:2x2
jax: 0.10.0
libtpu: 0.0.40
codegen_flags: <defaults>
</compile_context>

<pallas_src>
import functools

import jax
import jax.numpy as jnp
from jax.experimental import pallas as pl
from jax.experimental.pallas import tpu as pltpu


def head_kernel(xt_ref, xr_ref, w1_ref, ln_ref, w2_ref, mlp_ref, y_ref, *, apply_ln):
    """xt_ref/xr_ref:(TB,2E) bf16   w1_ref:(4E,2E) bf16   ln_ref:(3,2E)=[b1;gamma;beta] f32
    w2_ref:(2E,H) bf16   mlp_ref:(3,H)=[b2; w3-col-as-row; [b3,0,...]] f32   y_ref:(TB,1) f32"""
    twoE = w2_ref.shape[0]

    # ---- Linear(4E -> 2E): two half-K MXU pushes on the un-concatenated streams -----
    # h = [x_t | x_r] @ W1 + b1   (bf16 operands, f32 accumulation)
    h = jnp.dot(xt_ref[...], w1_ref[0:twoE, :], preferred_element_type=jnp.float32)
    h = h + jnp.dot(xr_ref[...], w1_ref[twoE:2 * twoE, :],
                    preferred_element_type=jnp.float32)
    h = h + ln_ref[0:1, :]                                   # b1 (f32)

    # ---- LayerNorm(2E), eps=1e-5 (PyTorch applies it only when batch > 1) -----------
    if apply_ln:
        inv_n = 1.0 / h.shape[-1]
        s1 = jnp.sum(h, axis=-1, keepdims=True)              # one-pass fused stats (f32)
        s2 = jnp.sum(h * h, axis=-1, keepdims=True)
        mean = s1 * inv_n
        var = s2 * inv_n - mean * mean                       # E[x^2] - E[x]^2
        h = (h - mean) * jax.lax.rsqrt(var + 1e-5)
        h = h * ln_ref[1:2, :] + ln_ref[2:3, :]              # gamma, beta

    # ---- ReLU (f32 on VPU — safe on v5e) ---------------------------------------------
    h = jnp.maximum(h, 0.0)

    # ---- MLP_revised: Dropout(id) -> Linear(2E,H) -> ReLU -> Dropout(id) -------------
    h2 = jnp.dot(h.astype(w2_ref.dtype), w2_ref[...],
                 preferred_element_type=jnp.float32) + mlp_ref[0:1, :]
    h2 = jnp.maximum(h2, 0.0)

    # ---- final Linear(H, 1): VPU mul + lane reduce (avoid N=1 MXU matmul) ------------
    y = jnp.sum(h2 * mlp_ref[1:2, :], axis=-1, keepdims=True) + mlp_ref[2:3, 0:1]
    y_ref[...] = y


def _round_up(x, m):
    return ((x + m - 1) // m) * m


def my_model_head(x_t, x_r, params, *, block_b=None, compute_dtype=jnp.bfloat16):
    """Fused head of myModel.forward (everything after the two GNN encoders)."""
    w1, ln_pack, w2, mlp_pack = params
    B, twoE = x_t.shape
    assert x_r.shape == (B, twoE)
    fourE = w1.shape[0]
    H = w2.shape[1]
    apply_ln = B > 1                       # matches `if x.size(0) > 1:` in PyTorch

    # Stream activations (dominant HBM traffic) and matmul weights in bf16; f32 accum.
    x_t = x_t.astype(compute_dtype)
    x_r = x_r.astype(compute_dtype)
    w1 = w1.astype(compute_dtype)
    w2 = w2.astype(compute_dtype)

    # Batch tile: single block for small B; for larger B keep >=2 grid steps (v7x has
    # two TensorCores sharded over the "parallel" axis) and tiles up to 2048 rows.
    if block_b is None:
        if B <= 256:
            block_b = B
        else:
            block_b = min(2048, _round_up(pl.cdiv(B, 2), 128))
    num_blocks = pl.cdiv(B, block_b)
    if num_blocks > 1:
        assert block_b % 8 == 0, "partial-batch tiling needs a sublane-aligned block"

    flops = B * (2 * fourE * twoE + 2 * twoE * H + 3 * H + 12 * twoE)
    bytes_accessed = (
        x_t.size * x_t.dtype.itemsize + x_r.size * x_r.dtype.itemsize
        + w1.size * w1.dtype.itemsize + w2.size * w2.dtype.itemsize
        + ln_pack.size * 4 + mlp_pack.size * 4 + B * 4)

    return pl.pallas_call(
        functools.partial(head_kernel, apply_ln=apply_ln),
        out_shape=jax.ShapeDtypeStruct((B, 1), jnp.float32),
        grid=(num_blocks,),
        in_specs=[
            pl.BlockSpec((block_b, twoE), lambda i: (i, 0)),   # x_t: streamed over batch
            pl.BlockSpec((block_b, twoE), lambda i: (i, 0)),   # x_r: streamed over batch
            pl.BlockSpec((fourE, twoE), lambda i: (0, 0)),     # W1 (VMEM-resident)
            pl.BlockSpec((3, twoE), lambda i: (0, 0)),         # [b1; gamma; beta]
            pl.BlockSpec((twoE, H), lambda i: (0, 0)),         # W2 (VMEM-resident)
            pl.BlockSpec((3, H), lambda i: (0, 0)),            # [b2; w3; b3|pad]
        ],
        out_specs=pl.BlockSpec((block_b, 1), lambda i: (i, 0)),
        compiler_params=pltpu.CompilerParams(
            dimension_semantics=("parallel",)),
        cost_estimate=pl.CostEstimate(
            flops=flops, transcendentals=B, bytes_accessed=bytes_accessed),
    )(x_t, x_r, w1, ln_pack, w2, mlp_pack)


def init_params(key, embedding_size=32, hidden=32):
    twoE = 2 * embedding_size
    fourE = 4 * embedding_size
    ks = jax.random.split(key, 6)
    scale = 0.05
    # nn.Linear(4E, 2E): weight stored here transposed to (in, out)
    w1 = scale * jax.random.normal(ks[0], (fourE, twoE), jnp.float32)
    b1 = scale * jax.random.normal(ks[1], (twoE,), jnp.float32)
    # nn.LayerNorm(2E)
    gamma = jnp.ones((twoE,), jnp.float32)
    beta = jnp.zeros((twoE,), jnp.float32)
    ln_pack = jnp.stack([b1, gamma, beta], axis=0)              # (3, 2E)
    # MLP_revised(2E, [32], 1): Linear(2E,H) -> ReLU -> Linear(H,1); dropouts = identity
    w2 = scale * jax.random.normal(ks[2], (twoE, hidden), jnp.float32)
    b2 = scale * jax.random.normal(ks[3], (hidden,), jnp.float32)
    w3 = scale * jax.random.normal(ks[4], (hidden,), jnp.float32)   # (H,1) column as a row
    b3 = scale * jax.random.normal(ks[5], (), jnp.float32)
    b3_row = jnp.zeros((hidden,), jnp.float32).at[0].set(b3)
    mlp_pack = jnp.stack([b2, w3, b3_row], axis=0)              # (3, H)
    return (w1, ln_pack, w2, mlp_pack)


def reference_head(x_t, x_r, params, compute_dtype=jnp.bfloat16):
    """Pure-JAX reference, mirroring the kernel's bf16-in / f32-accum precision."""
    w1, ln_pack, w2, mlp_pack = params
    twoE = w1.shape[1]
    b1, gamma, beta = ln_pack[0], ln_pack[1], ln_pack[2]
    b2, w3, b3 = mlp_pack[0], mlp_pack[1], mlp_pack[2, 0]
    xt = x_t.astype(compute_dtype)
    xr = x_r.astype(compute_dtype)
    w1c = w1.astype(compute_dtype)
    w2c = w2.astype(compute_dtype)
    h = (jnp.dot(xt, w1c[:twoE], preferred_element_type=jnp.float32)
         + jnp.dot(xr, w1c[twoE:], preferred_element_type=jnp.float32) + b1)
    if x_t.shape[0] > 1:
        mean = h.mean(-1, keepdims=True)
        var = ((h - mean) ** 2).mean(-1, keepdims=True)
        h = (h - mean) / jnp.sqrt(var + 1e-5) * gamma + beta
    h = jnp.maximum(h, 0.0)
    h2 = jnp.maximum(
        jnp.dot(h.astype(compute_dtype), w2c, preferred_element_type=jnp.float32) + b2,
        0.0)
    return jnp.sum(h2 * w3, axis=-1, keepdims=True) + b3


if __name__ == "__main__":
    # TODO(synk): GATencoder / GATencoder_raw (class GNN) are not defined in the provided
    # source, so the graph-attention encoders are not translated; their pooled embeddings
    # x_t, x_r are synthesized as kernel inputs instead.
    embedding_size = 32          # model_params['model_embedding_size']
    twoE = 2 * embedding_size

    key = jax.random.PRNGKey(0)
    k_xt, k_xr, k_p = jax.random.split(key, 3)
    params = init_params(k_p, embedding_size=embedding_size)

    # Exercise both compiled paths: B > 1 (LayerNorm active) and B == 1 (LN skipped).
    for B in (8, 1):
        x_t = jax.random.normal(jax.random.fold_in(k_xt, B), (B, twoE), jnp.float32)
        x_r = jax.random.normal(jax.random.fold_in(k_xr, B), (B, twoE), jnp.float32)

        y = my_model_head(x_t, x_r, params)
        jax.block_until_ready(y)
        assert y.shape == (B, 1)

        y_ref = reference_head(x_t, x_r, params)
        assert jnp.allclose(y, y_ref, atol=5e-3, rtol=5e-3), f"mismatch vs reference (B={B})"

    print("KERNEL_OK")
</pallas_src>

<mosaic_0001>
module attributes {stable_mosaic.version = 11 : i64} {
  func.func @head_kernel(%arg0: i32, %arg1: memref<8x64xbf16, #tpu.memory_space<vmem>>, %arg2: memref<8x64xbf16, #tpu.memory_space<vmem>>, %arg3: memref<128x64xbf16, #tpu.memory_space<vmem>>, %arg4: memref<3x64xf32, #tpu.memory_space<vmem>>, %arg5: memref<64x32xbf16, #tpu.memory_space<vmem>>, %arg6: memref<3x32xf32, #tpu.memory_space<vmem>>, %arg7: memref<8x1xf32, #tpu.memory_space<vmem>>) attributes {dimension_semantics = [#tpu.dimension_semantics<parallel>], iteration_bounds = array<i64: 1>, scalar_prefetch = 0 : i64, scratch_operands = 0 : i64, tpu.core_type = #tpu.core_type<tc>, window_params = [{transform_indices = @transform_0, window_bounds = array<i64: 8, 64>}, {transform_indices = @transform_1, window_bounds = array<i64: 8, 64>}, {pipeline_mode = #tpu.pipeline_mode<synchronous>, transform_indices = @transform_2, window_bounds = array<i64: 128, 64>}, {pipeline_mode = #tpu.pipeline_mode<synchronous>, transform_indices = @transform_3, window_bounds = array<i64: 3, 64>}, {pipeline_mode = #tpu.pipeline_mode<synchronous>, transform_indices = @transform_4, window_bounds = array<i64: 64, 32>}, {pipeline_mode = #tpu.pipeline_mode<synchronous>, transform_indices = @transform_5, window_bounds = array<i64: 3, 32>}, {transform_indices = @transform_6, window_bounds = array<i64: 8, 1>}]} {
    %c0 = arith.constant 0 : index
    %c0_0 = arith.constant 0 : index
    %0 = vector.load %arg1[%c0, %c0_0] : memref<8x64xbf16, #tpu.memory_space<vmem>>, vector<8x64xbf16>
    %c0_1 = arith.constant 0 : index
    %c0_2 = arith.constant 0 : index
    %1 = vector.load %arg3[%c0_1, %c0_2] : memref<128x64xbf16, #tpu.memory_space<vmem>>, vector<64x64xbf16>
    %cst = arith.constant dense<0.000000e+00> : vector<8x64xf32>
    %2 = tpu.matmul %0, %1, %cst {dimension_numbers = #tpu.dot_dimension_numbers<[1], [0], [0], [1], [0, 0, 1, 1], [], []>} : vector<8x64xbf16>, vector<64x64xbf16>, vector<8x64xf32> -> vector<8x64xf32>
    %c0_3 = arith.constant 0 : index
    %c0_4 = arith.constant 0 : index
    %3 = vector.load %arg2[%c0_3, %c0_4] : memref<8x64xbf16, #tpu.memory_space<vmem>>, vector<8x64xbf16>
    %c64 = arith.constant 64 : index
    %c0_5 = arith.constant 0 : index
    %4 = vector.load %arg3[%c64, %c0_5] : memref<128x64xbf16, #tpu.memory_space<vmem>>, vector<64x64xbf16>
    %cst_6 = arith.constant dense<0.000000e+00> : vector<8x64xf32>
    %5 = tpu.matmul %3, %4, %cst_6 {dimension_numbers = #tpu.dot_dimension_numbers<[1], [0], [0], [1], [0, 0, 1, 1], [], []>} : vector<8x64xbf16>, vector<64x64xbf16>, vector<8x64xf32> -> vector<8x64xf32>
    %6 = arith.addf %2, %5 : vector<8x64xf32>
    %c0_7 = arith.constant 0 : index
    %c0_8 = arith.constant 0 : index
    %7 = vector.load %arg4[%c0_7, %c0_8] : memref<3x64xf32, #tpu.memory_space<vmem>>, vector<1x64xf32>
    %8 = vector.broadcast %7 : vector<1x64xf32> to vector<8x64xf32>
    %9 = arith.addf %6, %8 : vector<8x64xf32>
    %cst_9 = arith.constant dense<0.000000e+00> : vector<8xf32>
    %10 = vector.multi_reduction <add>, %9, %cst_9 [1] : vector<8x64xf32> to vector<8xf32>
    %11 = vector.shape_cast %10 : vector<8xf32> to vector<8x1xf32>
    %12 = arith.mulf %9, %9 : vector<8x64xf32>
    %cst_10 = arith.constant dense<0.000000e+00> : vector<8xf32>
    %13 = vector.multi_reduction <add>, %12, %cst_10 [1] : vector<8x64xf32> to vector<8xf32>
    %14 = vector.shape_cast %13 : vector<8xf32> to vector<8x1xf32>
    %cst_11 = arith.constant 1.562500e-02 : f32
    %15 = vector.broadcast %cst_11 : f32 to vector<8x1xf32>
    %16 = arith.mulf %11, %15 : vector<8x1xf32>
    %cst_12 = arith.constant 1.562500e-02 : f32
    %17 = vector.broadcast %cst_12 : f32 to vector<8x1xf32>
    %18 = arith.mulf %14, %17 : vector<8x1xf32>
    %19 = arith.mulf %16, %16 : vector<8x1xf32>
    %20 = arith.subf %18, %19 : vector<8x1xf32>
    %21 = vector.broadcast %16 : vector<8x1xf32> to vector<8x64xf32>
    %22 = arith.subf %9, %21 : vector<8x64xf32>
    %cst_13 = arith.constant 9.99999974E-6 : f32
    %23 = vector.broadcast %cst_13 : f32 to vector<8x1xf32>
    %24 = arith.addf %20, %23 : vector<8x1xf32>
    %25 = math.rsqrt %24 : vector<8x1xf32>
    %26 = vector.broadcast %25 : vector<8x1xf32> to vector<8x64xf32>
    %27 = arith.mulf %22, %26 : vector<8x64xf32>
    %c1 = arith.constant 1 : index
    %c0_14 = arith.constant 0 : index
    %28 = vector.load %arg4[%c1, %c0_14] : memref<3x64xf32, #tpu.memory_space<vmem>>, vector<1x64xf32>
    %29 = vector.broadcast %28 : vector<1x64xf32> to vector<8x64xf32>
    %30 = arith.mulf %27, %29 : vector<8x64xf32>
    %c2 = arith.constant 2 : index
    %c0_15 = arith.constant 0 : index
    %31 = vector.load %arg4[%c2, %c0_15] : memref<3x64xf32, #tpu.memory_space<vmem>>, vector<1x64xf32>
    %32 = vector.broadcast %31 : vector<1x64xf32> to vector<8x64xf32>
    %33 = arith.addf %30, %32 : vector<8x64xf32>
    %cst_16 = arith.constant 0.000000e+00 : f32
    %34 = vector.broadcast %cst_16 : f32 to vector<8x64xf32>
    %35 = arith.maximumf %33, %34 : vector<8x64xf32>
    %36 = arith.truncf %35 : vector<8x64xf32> to vector<8x64xbf16>
    %c0_17 = arith.constant 0 : index
    %c0_18 = arith.constant 0 : index
    %37 = vector.load %arg5[%c0_17, %c0_18] : memref<64x32xbf16, #tpu.memory_space<vmem>>, vector<64x32xbf16>
    %cst_19 = arith.constant dense<0.000000e+00> : vector<8x32xf32>
    %38 = tpu.matmul %36, %37, %cst_19 {dimension_numbers = #tpu.dot_dimension_numbers<[1], [0], [0], [1], [0, 0, 1, 1], [], []>} : vector<8x64xbf16>, vector<64x32xbf16>, vector<8x32xf32> -> vector<8x32xf32>
    %c0_20 = arith.constant 0 : index
    %c0_21 = arith.constant 0 : index
    %39 = vector.load %arg6[%c0_20, %c0_21] : memref<3x32xf32, #tpu.memory_space<vmem>>, vector<1x32xf32>
    %40 = vector.broadcast %39 : vector<1x32xf32> to vector<8x32xf32>
    %41 = arith.addf %38, %40 : vector<8x32xf32>
    %cst_22 = arith.constant 0.000000e+00 : f32
    %42 = vector.broadcast %cst_22 : f32 to vector<8x32xf32>
    %43 = arith.maximumf %41, %42 : vector<8x32xf32>
    %c1_23 = arith.constant 1 : index
    %c0_24 = arith.constant 0 : index
    %44 = vector.load %arg6[%c1_23, %c0_24] : memref<3x32xf32, #tpu.memory_space<vmem>>, vector<1x32xf32>
    %45 = vector.broadcast %44 : vector<1x32xf32> to vector<8x32xf32>
    %46 = arith.mulf %43, %45 : vector<8x32xf32>
    %cst_25 = arith.constant dense<0.000000e+00> : vector<8xf32>
    %47 = vector.multi_reduction <add>, %46, %cst_25 [1] : vector<8x32xf32> to vector<8xf32>
    %48 = vector.shape_cast %47 : vector<8xf32> to vector<8x1xf32>
    %c2_26 = arith.constant 2 : index
    %c0_27 = arith.constant 0 : index
    %49 = vector.load %arg6[%c2_26, %c0_27] : memref<3x32xf32, #tpu.memory_space<vmem>>, vector<1x1xf32>
    %50 = vector.broadcast %49 : vector<1x1xf32> to vector<8x1xf32>
    %51 = arith.addf %48, %50 : vector<8x1xf32>
    %c0_28 = arith.constant 0 : index
    %c0_29 = arith.constant 0 : index
    %52 = vector.load %arg7[%c0_28, %c0_29] : memref<8x1xf32, #tpu.memory_space<vmem>>, vector<8x1xf32>
    tpu.vector_store %arg7[%c0_28, %c0_29], %51 {strides = array<i32>} : memref<8x1xf32, #tpu.memory_space<vmem>>, vector<8x1xf32>,
    return
  }
  func.func @transform_0(%arg0: i32) -> (i32, i32) {
    %c0_i32 = arith.constant 0 : i32
    %c0_i32_0 = arith.constant 0 : i32
    return %arg0, %c0_i32 : i32, i32
  }
  func.func @transform_1(%arg0: i32) -> (i32, i32) {
    %c0_i32 = arith.constant 0 : i32
    %c0_i32_0 = arith.constant 0 : i32
    return %arg0, %c0_i32 : i32, i32
  }
  func.func @transform_2(%arg0: i32) -> (i32, i32) {
    %c0_i32 = arith.constant 0 : i32
    %c0_i32_0 = arith.constant 0 : i32
    %c0_i32_1 = arith.constant 0 : i32
    return %c0_i32, %c0_i32_0 : i32, i32
  }
  func.func @transform_3(%arg0: i32) -> (i32, i32) {
    %c0_i32 = arith.constant 0 : i32
    %c0_i32_0 = arith.constant 0 : i32
    %c0_i32_1 = arith.constant 0 : i32
    return %c0_i32, %c0_i32_0 : i32, i32
  }
  func.func @transform_4(%arg0: i32) -> (i32, i32) {
    %c0_i32 = arith.constant 0 : i32
    %c0_i32_0 = arith.constant 0 : i32
    %c0_i32_1 = arith.constant 0 : i32
    return %c0_i32, %c0_i32_0 : i32, i32
  }
  func.func @transform_5(%arg0: i32) -> (i32, i32) {
    %c0_i32 = arith.constant 0 : i32
    %c0_i32_0 = arith.constant 0 : i32
    %c0_i32_1 = arith.constant 0 : i32
    return %c0_i32, %c0_i32_0 : i32, i32
  }
  func.func @transform_6(%arg0: i32) -> (i32, i32) {
    %c0_i32 = arith.constant 0 : i32
    %c0_i32_0 = arith.constant 0 : i32
    return %arg0, %c0_i32 : i32, i32
  }
}

</mosaic_0001>

<llo_original>
// kernel: tpu_custom_call.1
$region0: #{tpu_custom_call.1}
  #allocation0 [shape = 'u32[]', space=smem, size = 0x4, offset = 0x4, fixed_abs, tag = 'smem constant byte address 0x4 - core index']
  #allocation1 [shape = 'u32[72,128]{1,0:T(1,128)}', space=vmem, size = 0x9000, scoped, tag = 'internal scratch']
  %s0 = inlined_call_operand.vmem [shape: bf16[8,64], index: 0, kind: input, shape index: {}]
  %s1 = inlined_call_operand.vmem [shape: bf16[8,64], index: 1, kind: input, shape index: {}]
  %s2 = inlined_call_operand.vmem [shape: bf16[128,64], index: 2, kind: input, shape index: {}]
  %s3 = inlined_call_operand.vmem [shape: f32[3,64], index: 3, kind: input, shape index: {}]
  %s4 = inlined_call_operand.vmem [shape: bf16[64,32], index: 4, kind: input, shape index: {}]
  %s5 = inlined_call_operand.vmem [shape: f32[3,32], index: 5, kind: input, shape index: {}]
  %s6 = inlined_call_operand.vmem [shape: f32[8,1], index: 6, kind: output, shape index: {}]
  %s7 = sld [smem:[#allocation0]]
  $region34: #{tpu_custom_call.1} parent=0
    _
  %s9 = ssub.s32 1, %s7
  %s10 = scalar_select 0, %s9, %s7
  // Predicated region
  $region2: #{tpu_custom_call.1} parent=0 // pred_check
    _
  $region3: #{tpu_custom_call.1} parent=0 // pred_check_branch
    %12 = sbr.rel (0) target = $region5
  $region4: #{tpu_custom_call.1} parent=0 // pred_region
    _
  $region5: #{tpu_custom_call.1} parent=0 // pred_fallthru
    _
  // Predicated region
  $region6: #{tpu_custom_call.1} parent=0 // pred_check
    _
  $region7: #{tpu_custom_call.1} parent=0 // pred_check_branch
    %14 = sbr.rel (0) target = $region9
  $region8: #{tpu_custom_call.1} parent=0 // pred_region
    _
  $region9: #{tpu_custom_call.1} parent=0 // pred_fallthru
    _
  // Predicated region
  $region10: #{tpu_custom_call.1} parent=0 // pred_check
    _
  $region11: #{tpu_custom_call.1} parent=0 // pred_check_branch
    %16 = sbr.rel (0) target = $region13
  $region12: #{tpu_custom_call.1} parent=0 // pred_region
    _
  $region13: #{tpu_custom_call.1} parent=0 // pred_fallthru
    _
  // Predicated region
  $region14: #{tpu_custom_call.1} parent=0 // pred_check
    _
  $region15: #{tpu_custom_call.1} parent=0 // pred_check_branch
    %18 = sbr.rel (0) target = $region17
  $region16: #{tpu_custom_call.1} parent=0 // pred_region
    _
  $region17: #{tpu_custom_call.1} parent=0 // pred_fallthru
    _
  // Predicated region
  $region18: #{tpu_custom_call.1} parent=0 // pred_check
    _
  $region19: #{tpu_custom_call.1} parent=0 // pred_check_branch
    %20 = sbr.rel (0) target = $region21
  $region20: #{tpu_custom_call.1} parent=0 // pred_region
    _
  $region21: #{tpu_custom_call.1} parent=0 // pred_fallthru
    _
  // Predicated region
  $region22: #{tpu_custom_call.1} parent=0 // pred_check
    _
  $region23: #{tpu_custom_call.1} parent=0 // pred_check_branch
    %22 = sbr.rel (0) target = $region25
  $region24: #{tpu_custom_call.1} parent=0 // pred_region
    _
  $region25: #{tpu_custom_call.1} parent=0 // pred_fallthru
    _
  %v24 = vld [vmem:[%s0] sm:$0xf]
  %v25 = vld [vmem:[%s2] sm:$0xf]
  %v26 = vld [vmem:[%s2 + $0x4] sm:$0xf]
  %v27 = vld [vmem:[%s2 + $0x8] sm:$0xf]
  %v28 = vld [vmem:[%s2 + $0xc] sm:$0xf]
  %v29 = vld [vmem:[%s2 + $0x10] sm:$0xf]
  %v30 = vld [vmem:[%s2 + $0x14] sm:$0xf]
  %v31 = vld [vmem:[%s2 + $0x18] sm:$0xf]
  %v32 = vld [vmem:[%s2 + $0x1c] sm:$0xf]
  %v33 = vld [vmem:[%s1] sm:$0xf]
  %v34 = vld [vmem:[%s2 + $0x20] sm:$0xf]
  %v35 = vld [vmem:[%s2 + $0x24] sm:$0xf]
  %v36 = vld [vmem:[%s2 + $0x28] sm:$0xf]
  %v37 = vld [vmem:[%s2 + $0x2c] sm:$0xf]
  %v38 = vld [vmem:[%s2 + $0x30] sm:$0xf]
  %v39 = vld [vmem:[%s2 + $0x34] sm:$0xf]
  %v40 = vld [vmem:[%s2 + $0x38] sm:$0xf]
  %v41 = vld [vmem:[%s2 + $0x3c] sm:$0xf]
  %v50 = vunpack.c.l.b16 %v34
  %v51 = vunpack.c.l.b16 %v35
  %v52 = vunpack.c.l.b16 %v36
  %v53 = vunpack.c.l.b16 %v37
  %v54 = vunpack.c.l.b16 %v38
  %v55 = vunpack.c.l.b16 %v39
  %v56 = vunpack.c.l.b16 %v40
  %v57 = vunpack.c.l.b16 %v41
  %v58 = vpack.c.b16 %v51, %v50
  %v59 = vpack.c.b16 %v53, %v52
  %v60 = vpack.c.b16 %v55, %v54
  %v61 = vpack.c.b16 %v57, %v56
  %vm66 = vcmask 523264
  %v68 = vsel %vm66, %v33, 0
  %70 = vmatpush.bf16.msra.mxu0 0
  %71 = vmatpush.bf16.msra.mxu0 0
  %72 = vmatpush.bf16.msra.mxu0 0
  %73 = vmatpush.bf16.msra.mxu0 0
  %74 = vmatpush.bf16.msra.mxu0 %v61
  %75 = vmatpush.bf16.msra.mxu0 %v60
  %76 = vmatpush.bf16.msra.mxu0 %v59
  %77 = vmatpush.bf16.msra.mxu0 %v58
  %78 = vmatmul.bf16.gmra.mxu0 %v68
  %v79 = vpop.f32.mrf.mxu0
  %v80 = vadd.f32 0.0, %v79
  %v81 = vpop.f32.mrf.mxu0
  %82 = vdwg.mxu0
  %v91 = vunpack.c.l.b16 %v25
  %v92 = vunpack.c.l.b16 %v26
  %v93 = vunpack.c.l.b16 %v27
  %v94 = vunpack.c.l.b16 %v28
  %v95 = vunpack.c.l.b16 %v29
  %v96 = vunpack.c.l.b16 %v30
  %v97 = vunpack.c.l.b16 %v31
  %v98 = vunpack.c.l.b16 %v32
  %v99 = vpack.c.b16 %v92, %v91
  %v100 = vpack.c.b16 %v94, %v93
  %v101 = vpack.c.b16 %v96, %v95
  %v102 = vpack.c.b16 %v98, %v97
  %v108 = vsel %vm66, %v24, 0
  %110 = vmatpush.bf16.msra.mxu0 0
  %111 = vmatpush.bf16.msra.mxu0 0
  %112 = vmatpush.bf16.msra.mxu0 0
  %113 = vmatpush.bf16.msra.mxu0 0
  %114 = vmatpush.bf16.msra.mxu0 %v102
  %115 = vmatpush.bf16.msra.mxu0 %v101
  %116 = vmatpush.bf16.msra.mxu0 %v100
  %117 = vmatpush.bf16.msra.mxu0 %v99
  %118 = vmatmul.bf16.gmra.mxu0 %v108
  %v119 = vpop.f32.mrf.mxu0
  %v120 = vadd.f32 %v80, %v119
  %v121 = vpop.f32.mrf.mxu0
  %122 = vdwg.mxu0
  %v123 = vld [vmem:[%s3] sm:$0x1]
  %v124 = vperm.slane %v123, 0
  %v125 = vadd.f32 %v120, %v124
  %v126 = vsel %vm66, %v125, 0.0
  %127 = vadd.xlane.f32.xlu0 %v126
  %v128 = vpop.xlane.xlu0 %127
  %v129 = vmul.f32 %v125, %v125
  %v130 = vsel %vm66, %v129, 0.0
  %131 = vadd.xlane.f32.xlu0 %v130
  %v132 = vpop.xlane.xlu0 %131
  %v133 = vmul.f32 %v128, 0.015625
  %v134 = vmul.f32 %v132, 0.015625
  %v135 = vmul.f32 %v133, %v133
  %v136 = vsub.f32 %v134, %v135
  %v137 = vsub.f32 %v125, %v133
  %v138 = vadd.f32 %v136, 1e-05
  %v139 = vrsqrt.pop %v138
  %v140 = vmul.f32 %v139, %v138
  %v141 = vmul.f32 %v140, %v139
  %v142 = vmul.f32 0.5, %v141
  %v143 = vsub.f32 1.5, %v142
  %v144 = vmul.f32 %v139, %v143
  %vm145 = vweird.f32 %v138
  %vm146 = vweird.f32 %v139
  %vm147 = vmor %vm145, %vm146
  %v148 = vsel %vm147, %v139, %v144
  %v149 = vmul.f32 %v137, %v148
  %v150 = vld [vmem:[%s3 + $0x1] sm:$0x1]
  %v151 = vperm.slane %v150, 0
  %v152 = vmul.f32 %v149, %v151
  %v153 = vld [vmem:[%s3 + $0x2] sm:$0x1]
  %v154 = vperm.slane %v153, 0
  %v155 = vadd.f32 %v152, %v154
  %v156 = vmax.f32 %v155, 0.0
  %v157 = vpack.c.bf16 %v156, %v156
  %v158 = vld [vmem:[%s4] sm:$0xf]
  %v159 = vld [vmem:[%s4 + $0x4] sm:$0xf]
  %v160 = vld [vmem:[%s4 + $0x8] sm:$0xf]
  %v161 = vld [vmem:[%s4 + $0xc] sm:$0xf]
  %v162 = vld [vmem:[%s4 + $0x10] sm:$0xf]
  %v163 = vld [vmem:[%s4 + $0x14] sm:$0xf]
  %v164 = vld [vmem:[%s4 + $0x18] sm:$0xf]
  %v165 = vld [vmem:[%s4 + $0x1c] sm:$0xf]
  %v166 = vld [vmem:[%s5] sm:$0x1]
  %v167 = vperm.slane %v166, 0
  %v176 = vunpack.c.l.b16 %v158
  %v177 = vunpack.c.l.b16 %v159
  %v178 = vunpack.c.l.b16 %v160
  %v179 = vunpack.c.l.b16 %v161
  %v180 = vunpack.c.l.b16 %v162
  %v181 = vunpack.c.l.b16 %v163
  %v182 = vunpack.c.l.b16 %v164
  %v183 = vunpack.c.l.b16 %v165
  %v184 = vpack.c.b16 %v177, %v176
  %v185 = vpack.c.b16 %v179, %v178
  %v186 = vpack.c.b16 %v181, %v180
  %v187 = vpack.c.b16 %v183, %v182
  %v193 = vsel %vm66, %v157, 0
  %195 = vmatpush.bf16.msra.mxu0 0
  %196 = vmatpush.bf16.msra.mxu0 0
  %197 = vmatpush.bf16.msra.mxu0 0
  %198 = vmatpush.bf16.msra.mxu0 0
  %199 = vmatpush.bf16.msra.mxu0 %v187
  %200 = vmatpush.bf16.msra.mxu0 %v186
  %201 = vmatpush.bf16.msra.mxu0 %v185
  %202 = vmatpush.bf16.msra.mxu0 %v184
  %203 = vmatmul.bf16.gmra.mxu0 %v193
  %v204 = vpop.f32.mrf.mxu0
  %v205 = vadd.f32 %v167, %v204
  %v206 = vpop.f32.mrf.mxu0
  %207 = vdwg.mxu0
  %v208 = vmax.f32 %v205, 0.0
  %v209 = vld [vmem:[%s5 + $0x1] sm:$0x1]
  %v210 = vperm.slane %v209, 0
  %v211 = vmul.f32 %v208, %v210
  %vm212 = vcmask 261120
  %v213 = vsel %vm212, %v211, 0.0
  %214 = vadd.xlane.f32.xlu0 %v213
  %v215 = vpop.xlane.xlu0 %214
  %v216 = vld [vmem:[%s5 + $0x2] sm:$0x1]
  %v217 = vperm.slane %v216, 0
  %v218 = vadd.f32 %v215, %v217
  %vm219 = vcmask 7168
  %220 = vst.msk [vmem:[%s6] sm:$0xff] %vm219, %v218
  // Predicated region
  $region26: #{tpu_custom_call.1} parent=0 // pred_check
    _
  $region27: #{tpu_custom_call.1} parent=0 // pred_check_branch
    %222 = sbr.rel (0) target = $region29
  $region28: #{tpu_custom_call.1} parent=0 // pred_region
    _
  $region29: #{tpu_custom_call.1} parent=0 // pred_fallthru
    _
  // Predicated region
  $region30: #{tpu_custom_call.1} parent=0 // pred_check
    _
  $region31: #{tpu_custom_call.1} parent=0 // pred_check_branch
    %224 = sbr.rel (0) target = $region33
  $region32: #{tpu_custom_call.1} parent=0 // pred_region
    _
  $region33: #{tpu_custom_call.1} parent=0 // pred_fallthru
    _

</llo_original>
